<compile_context>
chip_gen: v7x
topology: tpu7x:2x2x1
jax: 0.10.0
libtpu: 0.0.40
codegen_flags: <defaults>
</compile_context>

<pallas_src>
import functools

import jax
import jax.numpy as jnp
from jax.experimental import pallas as pl
from jax.experimental.pallas import tpu as pltpu

LANES = 128
MAX_BLOCK_ROWS = 2048  # 2048 x 128 x 4B = 1 MiB per f32 input tile


def _charbonnier_partial_kernel(x_ref, y_ref, out_ref, *, eps2, n_real, block_rows):
    i = pl.program_id(0)

    # Cast to f32 in VMEM (halves HBM traffic for bf16/fp16 inputs).
    x = x_ref[...].astype(jnp.float32)
    y = y_ref[...].astype(jnp.float32)
    d = x - y
    val = jnp.sqrt(d * d + jnp.float32(eps2))

    # Mask everything past the real element count (tail-tile overhang and the
    # sub-128 remainder lanes) so it contributes exactly 0 to the sum.
    row = jax.lax.broadcasted_iota(jnp.int32, (block_rows, LANES), 0)
    col = jax.lax.broadcasted_iota(jnp.int32, (block_rows, LANES), 1)
    grow = i * block_rows + row          # global row index of each element
    last_row = n_real // LANES           # row containing the remainder (if any)
    rem = n_real % LANES
    mask = (grow < last_row) | ((grow == last_row) & (col < rem))
    val = jnp.where(mask, val, 0.0)

    # Row-reduce to a lane-dense (1, 128) partial (mostly VPU adds); the
    # cross-lane reduce happens once, in the wrapper, over (grid, 128).
    out_ref[...] = jnp.sum(val, axis=0, keepdims=True)


def charbonnier_loss(x, y, eps=1e-3):
    assert x.shape == y.shape, (x.shape, y.shape)
    n_real = x.size

    # Flatten (free for contiguous arrays); keep the native dtype.
    xf = x.reshape(-1)
    yf = y.reshape(-1)

    # Lane layout needs a multiple of 128 elements; only pad the (rare)
    # sub-128 remainder.  Padded positions are masked to 0 inside the kernel,
    # so no numerical correction is needed.
    pad = (-n_real) % LANES
    if pad:
        xf = jnp.pad(xf, (0, pad))
        yf = jnp.pad(yf, (0, pad))
    rows = (n_real + pad) // LANES
    x2 = xf.reshape(rows, LANES)
    y2 = yf.reshape(rows, LANES)

    # ~1 MiB per input per grid step, capped (and sublane-aligned) for small inputs.
    block_rows = min(MAX_BLOCK_ROWS, ((rows + 7) // 8) * 8)
    grid_len = pl.cdiv(rows, block_rows)

    partials = pl.pallas_call(
        functools.partial(
            _charbonnier_partial_kernel,
            eps2=float(eps) * float(eps),
            n_real=n_real,
            block_rows=block_rows,
        ),
        out_shape=jax.ShapeDtypeStruct((grid_len, LANES), jnp.float32),
        grid_spec=pltpu.PrefetchScalarGridSpec(
            num_scalar_prefetch=0,
            grid=(grid_len,),
            in_specs=[
                pl.BlockSpec((block_rows, LANES), lambda i: (i, 0)),
                pl.BlockSpec((block_rows, LANES), lambda i: (i, 0)),
            ],
            out_specs=pl.BlockSpec((1, LANES), lambda i: (i, 0)),
        ),
        compiler_params=pltpu.CompilerParams(
            dimension_semantics=("parallel",),  # no cross-step state -> megacore OK
        ),
    )(x2, y2)

    return jnp.sum(partials) / jnp.float32(n_real)


if __name__ == "__main__":
    key = jax.random.PRNGKey(0)
    kx, ky = jax.random.split(key)

    # NCHW, small shapes (like the PyTorch module's typical image inputs).
    x = jax.random.normal(kx, (2, 4, 16, 16), dtype=jnp.float32)
    y = jax.random.normal(ky, (2, 4, 16, 16), dtype=jnp.float32)

    loss = jax.block_until_ready(charbonnier_loss(x, y, eps=1e-3))
    d = x - y
    ref = jnp.mean(jnp.sqrt(d * d + 1e-3 * 1e-3))
    assert jnp.allclose(loss, ref, rtol=1e-5, atol=1e-6), (loss, ref)

    # Also exercise the non-multiple-of-128 masking path.
    ko1, ko2 = jax.random.split(ky)
    xo = jax.random.normal(ko1, (2, 3, 7, 11), dtype=jnp.float32)
    yo = jax.random.normal(ko2, (2, 3, 7, 11), dtype=jnp.float32)
    loss_o = jax.block_until_ready(charbonnier_loss(xo, yo, eps=1e-3))
    do = xo - yo
    ref_o = jnp.mean(jnp.sqrt(do * do + 1e-3 * 1e-3))
    assert jnp.allclose(loss_o, ref_o, rtol=1e-5, atol=1e-6), (loss_o, ref_o)

    print("KERNEL_OK")
</pallas_src>

<mosaic_0001>
module attributes {stable_mosaic.version = 11 : i64} {
  func.func @_charbonnier_partial_kernel(%arg0: i32, %arg1: memref<16x128xf32, #tpu.memory_space<vmem>>, %arg2: memref<16x128xf32, #tpu.memory_space<vmem>>, %arg3: memref<1x128xf32, #tpu.memory_space<vmem>>) attributes {dimension_semantics = [#tpu.dimension_semantics<parallel>], iteration_bounds = array<i64: 1>, scalar_prefetch = 0 : i64, scratch_operands = 0 : i64, tpu.core_type = #tpu.core_type<tc>, window_params = [{transform_indices = @transform_0, window_bounds = array<i64: 16, 128>}, {transform_indices = @transform_1, window_bounds = array<i64: 16, 128>}, {transform_indices = @transform_2, window_bounds = array<i64: 1, 128>}]} {
    %c0 = arith.constant 0 : index
    %c0_0 = arith.constant 0 : index
    %0 = vector.load %arg1[%c0, %c0_0] : memref<16x128xf32, #tpu.memory_space<vmem>>, vector<16x128xf32>
    %c0_1 = arith.constant 0 : index
    %c0_2 = arith.constant 0 : index
    %1 = vector.load %arg2[%c0_1, %c0_2] : memref<16x128xf32, #tpu.memory_space<vmem>>, vector<16x128xf32>
    %2 = arith.subf %0, %1 : vector<16x128xf32>
    %3 = arith.mulf %2, %2 : vector<16x128xf32>
    %cst = arith.constant 9.99999997E-7 : f32
    %4 = vector.broadcast %cst : f32 to vector<16x128xf32>
    %5 = arith.addf %3, %4 : vector<16x128xf32>
    %6 = math.sqrt %5 : vector<16x128xf32>
    %7 = tpu.iota {dimensions = array<i32: 0>} : vector<16x128xi32>
    %8 = tpu.iota {dimensions = array<i32: 1>} : vector<16x128xi32>
    %c16_i32 = arith.constant 16 : i32
    %9 = arith.muli %arg0, %c16_i32 : i32
    %10 = vector.broadcast %9 : i32 to vector<16x128xi32>
    %11 = arith.addi %10, %7 : vector<16x128xi32>
    %c16_i32_3 = arith.constant 16 : i32
    %12 = vector.broadcast %c16_i32_3 : i32 to vector<16x128xi32>
    %13 = arith.cmpi slt, %11, %12 : vector<16x128xi32>
    %c16_i32_4 = arith.constant 16 : i32
    %14 = vector.broadcast %c16_i32_4 : i32 to vector<16x128xi32>
    %15 = arith.cmpi eq, %11, %14 : vector<16x128xi32>
    %c0_i32 = arith.constant 0 : i32
    %16 = vector.broadcast %c0_i32 : i32 to vector<16x128xi32>
    %17 = arith.cmpi slt, %8, %16 : vector<16x128xi32>
    %18 = arith.andi %15, %17 : vector<16x128xi1>
    %19 = arith.ori %13, %18 : vector<16x128xi1>
    %cst_5 = arith.constant 0.000000e+00 : f32
    %20 = vector.broadcast %cst_5 : f32 to vector<16x128xf32>
    %21 = arith.select %19, %6, %20 : vector<16x128xi1>, vector<16x128xf32>
    %cst_6 = arith.constant dense<0.000000e+00> : vector<128xf32>
    %22 = vector.multi_reduction <add>, %21, %cst_6 [0] : vector<16x128xf32> to vector<128xf32>
    %23 = vector.shape_cast %22 : vector<128xf32> to vector<1x128xf32>
    %c0_7 = arith.constant 0 : index
    %c0_8 = arith.constant 0 : index
    %24 = vector.load %arg3[%c0_7, %c0_8] : memref<1x128xf32, #tpu.memory_space<vmem>>, vector<1x128xf32>
    tpu.vector_store %arg3[%c0_7, %c0_8], %23 {strides = array<i32>} : memref<1x128xf32, #tpu.memory_space<vmem>>, vector<1x128xf32>,
    return
  }
  func.func @transform_0(%arg0: i32) -> (i32, i32) {
    %c0_i32 = arith.constant 0 : i32
    %c0_i32_0 = arith.constant 0 : i32
    return %arg0, %c0_i32 : i32, i32
  }
  func.func @transform_1(%arg0: i32) -> (i32, i32) {
    %c0_i32 = arith.constant 0 : i32
    %c0_i32_0 = arith.constant 0 : i32
    return %arg0, %c0_i32 : i32, i32
  }
  func.func @transform_2(%arg0: i32) -> (i32, i32) {
    %c0_i32 = arith.constant 0 : i32
    %c0_i32_0 = arith.constant 0 : i32
    return %arg0, %c0_i32 : i32, i32
  }
}

</mosaic_0001>

<llo_original>
// kernel: tpu_custom_call.1
$region0: #{tpu_custom_call.1}
  #allocation0 [shape = 'u32[]', space=smem, size = 0x4, offset = 0x4, fixed_abs, tag = 'smem constant byte address 0x4 - core index']
  #allocation1 [shape = 'u32[144,128]{1,0:T(1,128)}', space=vmem, size = 0x12000, scoped, tag = 'internal scratch']
  %s0 = inlined_call_operand.hbm [shape: f32[16,128], index: 0, kind: input, shape index: {}]
  %s1 = inlined_call_operand.hbm [shape: f32[16,128], index: 1, kind: input, shape index: {}]
  %s2 = inlined_call_operand.hbm [shape: f32[1,128], index: 2, kind: output, shape index: {}]
  %s3 = sld [smem:[#allocation0]]
  $region26: #{tpu_custom_call.1} parent=0
    _
  %s5 = ssub.s32 1, %s3
  %s6 = scalar_select 0, %s5, %s3
  $region1: #{tpu_custom_call.1} parent=0
    #allocation2 [shape = 'u8[8192]{0}', space=vmem, size = 0x2000, scoped, tag = 'input window, operand 0, single buffered']
    #allocation3 [shape = 's32[1]{0}', space=sflag, size = 0x4, scoped, tag = 'scoped memory for tpu_custom_call.1']
    #allocation4 [shape = 's32[1]{0}', space=sflag, size = 0x4, scoped, tag = 'scoped memory for tpu_custom_call.1']
    #allocation5 [shape = 'u8[8192]{0}', space=vmem, size = 0x2000, scoped, tag = 'input window, operand 1, single buffered']
    #allocation6 [shape = 's32[1]{0}', space=sflag, size = 0x4, scoped, tag = 'scoped memory for tpu_custom_call.1']
    #allocation7 [shape = 'u8[512]{0}', space=vmem, size = 0x400, scoped, tag = 'output window, operand 0, single buffered']
    %7 = vsyncpa [#allocation3], 0
    %8 = vsyncpa [#allocation6], 0
    %9 = vsyncpa [#allocation4], 0
    // Predicated region
    $region2: #{tpu_custom_call.1} parent=1 // pred_check
      _
    $region3: #{tpu_custom_call.1} parent=1 // pred_check_branch
      %11 = sbr.rel (0) target = $region5
    $region4: #{tpu_custom_call.1} parent=1 // pred_region
      %s13 = ssub.s32 256, 256
      %14 = vsyncadd [#allocation3], %s13
      %s15 = sshll.u32 [#allocation2], 4
      %s16 = int_to_ptr.vmem [resolvable:$true] %s15
      %21 = dma.hbm_to_vmem [thread:$0]  %s0, 256, %s16, [#allocation3], 128, 128, 8
    $region5: #{tpu_custom_call.1} parent=1 // pred_fallthru
      _
    // Predicated region
    $region6: #{tpu_custom_call.1} parent=1 // pred_check
      _
    $region7: #{tpu_custom_call.1} parent=1 // pred_check_branch
      %23 = sbr.rel (0) target = $region9
    $region8: #{tpu_custom_call.1} parent=1 // pred_region
      %s25 = ssub.s32 256, 256
      %26 = vsyncadd [#allocation6], %s25
      %s27 = sshll.u32 [#allocation5], 4
      %s28 = int_to_ptr.vmem [resolvable:$true] %s27
      %33 = dma.hbm_to_vmem [thread:$0]  %s1, 256, %s28, [#allocation6], 128, 128, 8
    $region9: #{tpu_custom_call.1} parent=1 // pred_fallthru
      _
    // Predicated region
    $region10: #{tpu_custom_call.1} parent=1 // pred_check
      _
    $region11: #{tpu_custom_call.1} parent=1 // pred_check_branch
      %35 = sbr.rel (0) target = $region13
    $region12: #{tpu_custom_call.1} parent=1 // pred_region
      %36 = dma.done [#allocation3], 256
    $region13: #{tpu_custom_call.1} parent=1 // pred_fallthru
      _
    // Predicated region
    $region14: #{tpu_custom_call.1} parent=1 // pred_check
      _
    $region15: #{tpu_custom_call.1} parent=1 // pred_check_branch
      %38 = sbr.rel (0) target = $region17
    $region16: #{tpu_custom_call.1} parent=1 // pred_region
      %39 = dma.done [#allocation6], 256
    $region17: #{tpu_custom_call.1} parent=1 // pred_fallthru
      _
    %v40 = vld [vmem:[#allocation2] sm:$0xff]
    %v41 = vld [vmem:[#allocation2 + $0x8] sm:$0xff]
    %v42 = vld [vmem:[#allocation5] sm:$0xff]
    %v43 = vld [vmem:[#allocation5 + $0x8] sm:$0xff]
    %v44 = vsub.f32 %v40, %v42
    %v45 = vsub.f32 %v41, %v43
    %v46 = vmul.f32 %v44, %v44
    %v47 = vmul.f32 %v45, %v45
    %v48 = vadd.f32 %v46, 1e-06
    %v49 = vadd.f32 %v47, 1e-06
    %v50 = vrsqrt.pop %v48
    %v51 = vmul.f32 %v48, %v50
    %vm52 = vcmp.eq.f32.partialorder %v48, inf
    %v53 = vsel %vm52, %v48, %v51
    %vm54 = vcmp.eq.f32.partialorder %v48, 0.0
    %v55 = vand.u32 %v48, 2147483648
    %v56 = vsel %vm54, %v55, %v53
    %v57 = vrsqrt.pop %v49
    %v58 = vmul.f32 %v49, %v57
    %vm59 = vcmp.eq.f32.partialorder %v49, inf
    %v60 = vsel %vm59, %v49, %v58
    %vm61 = vcmp.eq.f32.partialorder %v49, 0.0
    %v62 = vand.u32 %v49, 2147483648
    %v63 = vsel %vm61, %v62, %v60
    %v64 = vlaneseq
    %v65 = vshrl.u32 %v64, 7
    %v66 = vadd.s32 %v65, 8
    %v67 = vlaneseq
    %v68 = vand.u32 %v67, 127
    %s69 = smul.u32 0, 16
    %v70 = vstv %s69
    %v71 = vadd.s32 %v70, %v65
    %v72 = vadd.s32 %v70, %v66
    %vm73 = vcmp.lt.s32.totalorder %v71, 16
    %vm74 = vcmp.lt.s32.totalorder %v72, 16
    %vm75 = vcmp.eq.s32.totalorder %v71, 16
    %vm76 = vcmp.eq.s32.totalorder %v72, 16
    %vm77 = vcmp.lt.s32.totalorder %v68, 0
    %vm78 = vmand %vm75, %vm77
    %vm79 = vmand %vm76, %vm77
    %vm80 = vmor %vm73, %vm78
    %vm81 = vmor %vm74, %vm79
    %v82 = vsel %vm80, %v56, 0.0
    %v83 = vsel %vm81, %v63, 0.0
    %v84 = vadd.f32 %v82, %v83
    %v85 = vrot.slane %v84, 4
    %v86 = vadd.f32 %v84, %v85
    %v87 = vrot.slane %v86, 2
    %v88 = vadd.f32 %v86, %v87
    %v89 = vrot.slane %v88, 1
    %v90 = vadd.f32 %v88, %v89
    %91 = vst [vmem:[#allocation7] sm:$0x1] %v90
    // Predicated region
    $region18: #{tpu_custom_call.1} parent=1 // pred_check
      _
    $region19: #{tpu_custom_call.1} parent=1 // pred_check_branch
      %93 = sbr.rel (0) target = $region21
    $region20: #{tpu_custom_call.1} parent=1 // pred_region
      %s95 = ssub.s32 16, 16
      %96 = vsyncadd [#allocation4], %s95
      %s98 = sshll.u32 [#allocation7], 4
      %s99 = int_to_ptr.vmem [resolvable:$true] %s98
      %101 = dma.vmem_to_hbm [thread:$0]  %s99, 16, %s2, [#allocation4]
    $region21: #{tpu_custom_call.1} parent=1 // pred_fallthru
      _
    // Predicated region
    $region22: #{tpu_custom_call.1} parent=1 // pred_check
      _
    $region23: #{tpu_custom_call.1} parent=1 // pred_check_branch
      %103 = sbr.rel (0) target = $region25
    $region24: #{tpu_custom_call.1} parent=1 // pred_region
      %104 = dma.done [#allocation4], 16
    $region25: #{tpu_custom_call.1} parent=1 // pred_fallthru
      _
    %105 = vsyncpa [#allocation3], 1
    %106 = vsyncpa [#allocation6], 1
    %107 = vsyncpa [#allocation4], 1

</llo_original>
